<compile_context>
chip_gen: v6e
topology: v6e:2x2x1
jax: 0.10.0
libtpu: 0.0.40
codegen_flags: <defaults>
</compile_context>

<pallas_src>
import functools

import jax
import jax.numpy as jnp
from jax.experimental import pallas as pl
from jax.experimental.pallas import tpu as pltpu

OUT_CH = 32


def _round_up(x, m):
    return ((x + m - 1) // m) * m


def _inception_kernel(x_ref, x3_ref, wstack_ref, w3_ref, o1_ref, o2_ref, o3_ref, *, W):
    # x_ref:      (C_pad, L)       L = Bt*S_pad; channels in sublanes, spatial in lanes
    # x3_ref:     (3, C_pad, L3)   L3 = Bt*S3_pad; the 3 max-pool taps as leading slabs
    # wstack_ref: (8*32, C_pad)    composed taps: 3 of branch1 then 5 of branch2
    #                              (bias folded into the ones-channel column of tap 0)
    # w3_ref:     (32, C_pad)      1x1 conv of branch3 (bias folded likewise)
    # o1/o2/o3:   (32, L), (32, L), (32, L3)
    x = x_ref[...]
    L = x.shape[1]

    # One wide MXU matmul covering all 8 composed conv taps for the whole block.
    z = jnp.dot(wstack_ref[...], x, preferred_element_type=jnp.float32)   # (256, L)

    # Branch 1: sum of 3 taps; tap k needs row h+k -> left lane shift of k*W,
    # done as a full-width XLU roll (left shift == roll by L - k*W).  Only the
    # first H1*W lanes of each image segment are meaningful; wrapper trims them.
    y1 = z[0 * OUT_CH:1 * OUT_CH, :]
    for k in range(1, 3):
        y1 = y1 + pltpu.roll(z[k * OUT_CH:(k + 1) * OUT_CH, :], L - k * W, axis=1)
    o1_ref[...] = y1

    # Branch 2: sum of 5 taps.
    y2 = z[3 * OUT_CH:4 * OUT_CH, :]
    for k in range(1, 5):
        y2 = y2 + pltpu.roll(z[(3 + k) * OUT_CH:(4 + k) * OUT_CH, :], L - k * W, axis=1)
    o2_ref[...] = y2

    # Branch 3: MaxPool2d((3,1)) == elementwise max over the 3 wrapper-provided
    # slabs (zero lane shuffles), then the 1x1 conv as one small matmul.
    pooled = jnp.maximum(jnp.maximum(x3_ref[0], x3_ref[1]), x3_ref[2])    # (C_pad, L3)
    o3_ref[...] = jnp.dot(w3_ref[...], pooled, preferred_element_type=jnp.float32)


def _multi_tensorcore():
    # Conservative: only chips known to have >1 TensorCore per chip benefit from
    # splitting the (tiny) grid; everything else prefers one big grid step.
    try:
        kind = jax.devices()[0].device_kind.lower()
    except Exception:
        return False
    return ("v4" in kind) or ("v5p" in kind) or ("v7" in kind)


def _pick_bt(B, per_image_bytes, multi_tc, budget_bytes=6 * 1024 * 1024):
    divisors = [d for d in range(1, B + 1) if B % d == 0]
    bt = 1
    for d in divisors:
        if d * per_image_bytes <= budget_bytes:
            bt = d
    if multi_tc and bt == B and B >= 2:
        # keep >= 2 parallel grid blocks for dual-TensorCore chips
        bt = max(d for d in divisors if d < B)
    return bt


def inception_forward(x_nchw, params):
    """x_nchw: (B, C_in, H, W) float32.  Returns (B, 32, (H-2)+(H-4)+H//3, W)."""
    B, C, H, W = x_nchw.shape
    assert H >= 5, "Inception needs H >= 5 (the (5,1) conv must be valid)"
    H1, H2, H3 = H - 2, H - 4, H // 3
    S = H * W
    S_pad = _round_up(S, 128)
    S3_pad = _round_up(H3 * W, 128)
    C_pad = max(8, _round_up(C + 1, 8))          # +1 for the constant-1 bias channel
    f32 = jnp.float32
    hi = jax.lax.Precision.HIGHEST

    # ---- compose the 1x1 convs into the (k,1) conv taps; fold biases into an
    # ---- extra ones-channel column (all tiny, wrapper-side) ----
    A1 = params['w1a'][:, :, 0, 0].astype(f32)                 # (32, C)
    A2 = params['w2a'][:, :, 0, 0].astype(f32)
    W1b = params['w1b'][:, :, :, 0].astype(f32)                # (32, 32, 3)  [o, m, kh]
    W2b = params['w2b'][:, :, :, 0].astype(f32)                # (32, 32, 5)
    Wc1 = jnp.einsum('omk,mc->koc', W1b, A1, precision=hi)     # (3, 32, C)
    Wc2 = jnp.einsum('omk,mc->koc', W2b, A2, precision=hi)     # (5, 32, C)
    b1c = params['b1b'].astype(f32) + jnp.einsum('omk,m->o', W1b,
                                                 params['b1a'].astype(f32), precision=hi)
    b2c = params['b2b'].astype(f32) + jnp.einsum('omk,m->o', W2b,
                                                 params['b2a'].astype(f32), precision=hi)

    wstack = jnp.zeros((8 * OUT_CH, C_pad), f32)
    wstack = wstack.at[0:3 * OUT_CH, :C].set(Wc1.reshape(3 * OUT_CH, C))
    wstack = wstack.at[3 * OUT_CH:8 * OUT_CH, :C].set(Wc2.reshape(5 * OUT_CH, C))
    wstack = wstack.at[0:OUT_CH, C].set(b1c)                   # bias only on tap 0
    wstack = wstack.at[3 * OUT_CH:4 * OUT_CH, C].set(b2c)

    w3 = jnp.zeros((OUT_CH, C_pad), f32)
    w3 = w3.at[:, :C].set(params['w3'][:, :, 0, 0].astype(f32))
    w3 = w3.at[:, C].set(params['b3'].astype(f32))

    # ---- layout: padded channels (+ ones) in sublanes, spatial in lanes,
    # ---- images side by side in 128-aligned lane segments (no masked stores) ----
    x_aug = jnp.concatenate(
        [x_nchw.astype(f32),
         jnp.ones((B, 1, H, W), f32),
         jnp.zeros((B, C_pad - C - 1, H, W), f32)], axis=1)    # (B, C_pad, H, W)

    x_flat = x_aug.reshape(B, C_pad, S)
    x_flat = jnp.pad(x_flat, ((0, 0), (0, 0), (0, S_pad - S)))
    x_wide = x_flat.transpose(1, 0, 2).reshape(C_pad, B * S_pad)

    # 3-slab view for the (3,1)/stride-(3,1) max-pool: slab r holds row 3j+r of
    # every window j, so the in-kernel pool is one full-width max.
    x_pool = x_aug[:, :, :3 * H3, :].reshape(B, C_pad, H3, 3, W)
    x_pool = x_pool.transpose(3, 1, 0, 2, 4).reshape(3, C_pad, B, H3 * W)
    x_pool = jnp.pad(x_pool, ((0, 0), (0, 0), (0, 0), (0, S3_pad - H3 * W)))
    x_pool = x_pool.reshape(3, C_pad, B * S3_pad)

    # ---- generation-aware batch blocking under a VMEM budget ----
    per_image_bytes = 4 * (C_pad * S_pad + 3 * C_pad * S3_pad          # inputs
                           + (8 * OUT_CH) * S_pad                      # z
                           + 8 * OUT_CH * S_pad                        # roll/add temps
                           + 2 * OUT_CH * S_pad + OUT_CH * S3_pad)     # outputs
    per_image_bytes *= 2                                               # double-buffer headroom
    Bt = _pick_bt(B, per_image_bytes, _multi_tensorcore())
    grid = (B // Bt,)

    o1, o2, o3 = pl.pallas_call(
        functools.partial(_inception_kernel, W=W),
        out_shape=(jax.ShapeDtypeStruct((OUT_CH, B * S_pad), f32),
                   jax.ShapeDtypeStruct((OUT_CH, B * S_pad), f32),
                   jax.ShapeDtypeStruct((OUT_CH, B * S3_pad), f32)),
        grid=grid,
        in_specs=[
            pl.BlockSpec((C_pad, Bt * S_pad), lambda i: (0, i)),
            pl.BlockSpec((3, C_pad, Bt * S3_pad), lambda i: (0, 0, i)),
            pl.BlockSpec((8 * OUT_CH, C_pad), lambda i: (0, 0)),
            pl.BlockSpec((OUT_CH, C_pad), lambda i: (0, 0)),
        ],
        out_specs=(
            pl.BlockSpec((OUT_CH, Bt * S_pad), lambda i: (0, i)),
            pl.BlockSpec((OUT_CH, Bt * S_pad), lambda i: (0, i)),
            pl.BlockSpec((OUT_CH, Bt * S3_pad), lambda i: (0, i)),
        ),
        compiler_params=pltpu.CompilerParams(
            dimension_semantics=("parallel",),
            vmem_limit_bytes=32 * 1024 * 1024),
    )(x_wide, x_pool, wstack, w3)

    # ---- trim padded segments and rebuild NCHW (layout plumbing only) ----
    y1 = o1.reshape(OUT_CH, B, S_pad).transpose(1, 0, 2)[:, :, :H1 * W].reshape(B, OUT_CH, H1, W)
    y2 = o2.reshape(OUT_CH, B, S_pad).transpose(1, 0, 2)[:, :, :H2 * W].reshape(B, OUT_CH, H2, W)
    y3 = o3.reshape(OUT_CH, B, S3_pad).transpose(1, 0, 2)[:, :, :H3 * W].reshape(B, OUT_CH, H3, W)
    return jnp.concatenate([y1, y2, y3], axis=2)


# ---------------- plain-JAX reference (PyTorch semantics) ----------------
def _conv2d_nchw(x, w, b):
    y = jax.lax.conv_general_dilated(
        x, w, window_strides=(1, 1), padding='VALID',
        dimension_numbers=('NCHW', 'OIHW', 'NCHW'))
    return y + b[None, :, None, None]


def inception_reference(x, p):
    c1 = _conv2d_nchw(_conv2d_nchw(x, p['w1a'], p['b1a']), p['w1b'], p['b1b'])
    c2 = _conv2d_nchw(_conv2d_nchw(x, p['w2a'], p['b2a']), p['w2b'], p['b2b'])
    pooled = jax.lax.reduce_window(x, -jnp.inf, jax.lax.max,
                                   (1, 1, 3, 1), (1, 1, 3, 1), 'VALID')
    c3 = _conv2d_nchw(pooled, p['w3'], p['b3'])
    return jnp.concatenate([c1, c2, c3], axis=2)


def make_params(key, in_channels):
    ks = jax.random.split(key, 10)
    n = jax.random.normal
    return {
        'w1a': 0.1 * n(ks[0], (OUT_CH, in_channels, 1, 1), jnp.float32),
        'b1a': 0.1 * n(ks[1], (OUT_CH,), jnp.float32),
        'w1b': 0.1 * n(ks[2], (OUT_CH, OUT_CH, 3, 1), jnp.float32),
        'b1b': 0.1 * n(ks[3], (OUT_CH,), jnp.float32),
        'w2a': 0.1 * n(ks[4], (OUT_CH, in_channels, 1, 1), jnp.float32),
        'b2a': 0.1 * n(ks[5], (OUT_CH,), jnp.float32),
        'w2b': 0.1 * n(ks[6], (OUT_CH, OUT_CH, 5, 1), jnp.float32),
        'b2b': 0.1 * n(ks[7], (OUT_CH,), jnp.float32),
        'w3': 0.1 * n(ks[8], (OUT_CH, in_channels, 1, 1), jnp.float32),
        'b3': 0.1 * n(ks[9], (OUT_CH,), jnp.float32),
    }


if __name__ == "__main__":
    key = jax.random.PRNGKey(0)
    k_x, k_p = jax.random.split(key)

    B, C_in, H, W = 2, 4, 16, 16
    x = jax.random.normal(k_x, (B, C_in, H, W), jnp.float32)
    params = make_params(k_p, C_in)

    fwd = jax.jit(inception_forward)
    out = fwd(x, params)
    out = jax.block_until_ready(out)

    ref = inception_reference(x, params)
    expected_shape = (B, OUT_CH, (H - 2) + (H - 4) + H // 3, W)
    assert out.shape == expected_shape, (out.shape, expected_shape)
    assert jnp.allclose(out, ref, atol=1e-4, rtol=1e-4), float(jnp.max(jnp.abs(out - ref)))

    print("KERNEL_OK")
</pallas_src>

<mosaic_0001>
module attributes {stable_mosaic.version = 11 : i64} {
  func.func @_inception_kernel(%arg0: i32, %arg1: memref<8x512xf32, #tpu.memory_space<vmem>>, %arg2: memref<3x8x256xf32, #tpu.memory_space<vmem>>, %arg3: memref<256x8xf32, #tpu.memory_space<vmem>>, %arg4: memref<32x8xf32, #tpu.memory_space<vmem>>, %arg5: memref<32x512xf32, #tpu.memory_space<vmem>>, %arg6: memref<32x512xf32, #tpu.memory_space<vmem>>, %arg7: memref<32x256xf32, #tpu.memory_space<vmem>>) attributes {dimension_semantics = [#tpu.dimension_semantics<parallel>], iteration_bounds = array<i64: 1>, scalar_prefetch = 0 : i64, scratch_operands = 0 : i64, tpu.core_type = #tpu.core_type<tc>, window_params = [{transform_indices = @transform_0, window_bounds = array<i64: 8, 512>}, {transform_indices = @transform_1, window_bounds = array<i64: 3, 8, 256>}, {pipeline_mode = #tpu.pipeline_mode<synchronous>, transform_indices = @transform_2, window_bounds = array<i64: 256, 8>}, {pipeline_mode = #tpu.pipeline_mode<synchronous>, transform_indices = @transform_3, window_bounds = array<i64: 32, 8>}, {transform_indices = @transform_4, window_bounds = array<i64: 32, 512>}, {transform_indices = @transform_5, window_bounds = array<i64: 32, 512>}, {transform_indices = @transform_6, window_bounds = array<i64: 32, 256>}]} {
    %c0 = arith.constant 0 : index
    %c0_0 = arith.constant 0 : index
    %0 = vector.load %arg1[%c0, %c0_0] : memref<8x512xf32, #tpu.memory_space<vmem>>, vector<8x512xf32>
    %c0_1 = arith.constant 0 : index
    %c0_2 = arith.constant 0 : index
    %1 = vector.load %arg3[%c0_1, %c0_2] : memref<256x8xf32, #tpu.memory_space<vmem>>, vector<256x8xf32>
    %cst = arith.constant dense<0.000000e+00> : vector<256x512xf32>
    %2 = tpu.matmul %1, %0, %cst {dimension_numbers = #tpu.dot_dimension_numbers<[1], [0], [0], [1], [0, 0, 1, 1], [], []>} : vector<256x8xf32>, vector<8x512xf32>, vector<256x512xf32> -> vector<256x512xf32>
    %3 = vector.extract_strided_slice %2 {offsets = [0, 0], sizes = [32, 512], strides = [1, 1]} : vector<256x512xf32> to vector<32x512xf32>
    %4 = vector.extract_strided_slice %2 {offsets = [32, 0], sizes = [32, 512], strides = [1, 1]} : vector<256x512xf32> to vector<32x512xf32>
    %c496_i32 = arith.constant 496 : i32
    %5 = tpu.dynamic_rotate %4 by %c496_i32 dim 1 : vector<32x512xf32>, i32 -> vector<32x512xf32>
    %6 = arith.addf %3, %5 : vector<32x512xf32>
    %7 = vector.extract_strided_slice %2 {offsets = [64, 0], sizes = [32, 512], strides = [1, 1]} : vector<256x512xf32> to vector<32x512xf32>
    %c480_i32 = arith.constant 480 : i32
    %8 = tpu.dynamic_rotate %7 by %c480_i32 dim 1 : vector<32x512xf32>, i32 -> vector<32x512xf32>
    %9 = arith.addf %6, %8 : vector<32x512xf32>
    %c0_3 = arith.constant 0 : index
    %c0_4 = arith.constant 0 : index
    %10 = vector.load %arg5[%c0_3, %c0_4] : memref<32x512xf32, #tpu.memory_space<vmem>>, vector<32x512xf32>
    tpu.vector_store %arg5[%c0_3, %c0_4], %9 {strides = array<i32>} : memref<32x512xf32, #tpu.memory_space<vmem>>, vector<32x512xf32>,
    %11 = vector.extract_strided_slice %2 {offsets = [96, 0], sizes = [32, 512], strides = [1, 1]} : vector<256x512xf32> to vector<32x512xf32>
    %12 = vector.extract_strided_slice %2 {offsets = [128, 0], sizes = [32, 512], strides = [1, 1]} : vector<256x512xf32> to vector<32x512xf32>
    %c496_i32_5 = arith.constant 496 : i32
    %13 = tpu.dynamic_rotate %12 by %c496_i32_5 dim 1 : vector<32x512xf32>, i32 -> vector<32x512xf32>
    %14 = arith.addf %11, %13 : vector<32x512xf32>
    %15 = vector.extract_strided_slice %2 {offsets = [160, 0], sizes = [32, 512], strides = [1, 1]} : vector<256x512xf32> to vector<32x512xf32>
    %c480_i32_6 = arith.constant 480 : i32
    %16 = tpu.dynamic_rotate %15 by %c480_i32_6 dim 1 : vector<32x512xf32>, i32 -> vector<32x512xf32>
    %17 = arith.addf %14, %16 : vector<32x512xf32>
    %18 = vector.extract_strided_slice %2 {offsets = [192, 0], sizes = [32, 512], strides = [1, 1]} : vector<256x512xf32> to vector<32x512xf32>
    %c464_i32 = arith.constant 464 : i32
    %19 = tpu.dynamic_rotate %18 by %c464_i32 dim 1 : vector<32x512xf32>, i32 -> vector<32x512xf32>
    %20 = arith.addf %17, %19 : vector<32x512xf32>
    %21 = vector.extract_strided_slice %2 {offsets = [224, 0], sizes = [32, 512], strides = [1, 1]} : vector<256x512xf32> to vector<32x512xf32>
    %c448_i32 = arith.constant 448 : i32
    %22 = tpu.dynamic_rotate %21 by %c448_i32 dim 1 : vector<32x512xf32>, i32 -> vector<32x512xf32>
    %23 = arith.addf %20, %22 : vector<32x512xf32>
    %c0_7 = arith.constant 0 : index
    %c0_8 = arith.constant 0 : index
    %24 = vector.load %arg6[%c0_7, %c0_8] : memref<32x512xf32, #tpu.memory_space<vmem>>, vector<32x512xf32>
    tpu.vector_store %arg6[%c0_7, %c0_8], %23 {strides = array<i32>} : memref<32x512xf32, #tpu.memory_space<vmem>>, vector<32x512xf32>,
    %c0_9 = arith.constant 0 : index
    %c0_10 = arith.constant 0 : index
    %c0_11 = arith.constant 0 : index
    %25 = vector.load %arg2[%c0_9, %c0_10, %c0_11] : memref<3x8x256xf32, #tpu.memory_space<vmem>>, vector<1x8x256xf32>
    %26 = vector.shape_cast %25 : vector<1x8x256xf32> to vector<8x256xf32>
    %c1 = arith.constant 1 : index
    %c0_12 = arith.constant 0 : index
    %c0_13 = arith.constant 0 : index
    %27 = vector.load %arg2[%c1, %c0_12, %c0_13] : memref<3x8x256xf32, #tpu.memory_space<vmem>>, vector<1x8x256xf32>
    %28 = vector.shape_cast %27 : vector<1x8x256xf32> to vector<8x256xf32>
    %29 = arith.maximumf %26, %28 : vector<8x256xf32>
    %c2 = arith.constant 2 : index
    %c0_14 = arith.constant 0 : index
    %c0_15 = arith.constant 0 : index
    %30 = vector.load %arg2[%c2, %c0_14, %c0_15] : memref<3x8x256xf32, #tpu.memory_space<vmem>>, vector<1x8x256xf32>
    %31 = vector.shape_cast %30 : vector<1x8x256xf32> to vector<8x256xf32>
    %32 = arith.maximumf %29, %31 : vector<8x256xf32>
    %c0_16 = arith.constant 0 : index
    %c0_17 = arith.constant 0 : index
    %33 = vector.load %arg4[%c0_16, %c0_17] : memref<32x8xf32, #tpu.memory_space<vmem>>, vector<32x8xf32>
    %cst_18 = arith.constant dense<0.000000e+00> : vector<32x256xf32>
    %34 = tpu.matmul %33, %32, %cst_18 {dimension_numbers = #tpu.dot_dimension_numbers<[1], [0], [0], [1], [0, 0, 1, 1], [], []>} : vector<32x8xf32>, vector<8x256xf32>, vector<32x256xf32> -> vector<32x256xf32>
    %c0_19 = arith.constant 0 : index
    %c0_20 = arith.constant 0 : index
    %35 = vector.load %arg7[%c0_19, %c0_20] : memref<32x256xf32, #tpu.memory_space<vmem>>, vector<32x256xf32>
    tpu.vector_store %arg7[%c0_19, %c0_20], %34 {strides = array<i32>} : memref<32x256xf32, #tpu.memory_space<vmem>>, vector<32x256xf32>,
    return
  }
  func.func @transform_0(%arg0: i32) -> (i32, i32) {
    %c0_i32 = arith.constant 0 : i32
    %c0_i32_0 = arith.constant 0 : i32
    return %c0_i32, %arg0 : i32, i32
  }
  func.func @transform_1(%arg0: i32) -> (i32, i32, i32) {
    %c0_i32 = arith.constant 0 : i32
    %c0_i32_0 = arith.constant 0 : i32
    %c0_i32_1 = arith.constant 0 : i32
    return %c0_i32, %c0_i32_0, %arg0 : i32, i32, i32
  }
  func.func @transform_2(%arg0: i32) -> (i32, i32) {
    %c0_i32 = arith.constant 0 : i32
    %c0_i32_0 = arith.constant 0 : i32
    %c0_i32_1 = arith.constant 0 : i32
    return %c0_i32, %c0_i32_0 : i32, i32
  }
  func.func @transform_3(%arg0: i32) -> (i32, i32) {
    %c0_i32 = arith.constant 0 : i32
    %c0_i32_0 = arith.constant 0 : i32
    %c0_i32_1 = arith.constant 0 : i32
    return %c0_i32, %c0_i32_0 : i32, i32
  }
  func.func @transform_4(%arg0: i32) -> (i32, i32) {
    %c0_i32 = arith.constant 0 : i32
    %c0_i32_0 = arith.constant 0 : i32
    return %c0_i32, %arg0 : i32, i32
  }
  func.func @transform_5(%arg0: i32) -> (i32, i32) {
    %c0_i32 = arith.constant 0 : i32
    %c0_i32_0 = arith.constant 0 : i32
    return %c0_i32, %arg0 : i32, i32
  }
  func.func @transform_6(%arg0: i32) -> (i32, i32) {
    %c0_i32 = arith.constant 0 : i32
    %c0_i32_0 = arith.constant 0 : i32
    return %c0_i32, %arg0 : i32, i32
  }
}

</mosaic_0001>

<llo_original>
// kernel: inception_forward.1
$region0: #{inception_forward.1}
  #allocation0 [shape = 'u32[]', space=smem, size = 0x4, offset = 0x4, fixed_abs, tag = 'smem constant byte address 0x4 - core index']
  #allocation1 [shape = 'u32[144,128]{1,0:T(1,128)}', space=vmem, size = 0x12000, scoped, tag = 'internal scratch']
  %s0 = inlined_call_operand.vmem [shape: f32[8,512], index: 0, kind: input, shape index: {}]
  %s1 = inlined_call_operand.vmem [shape: f32[3,8,256], index: 1, kind: input, shape index: {}]
  %s2 = inlined_call_operand.vmem [shape: f32[256,8], index: 2, kind: input, shape index: {}]
  %s3 = inlined_call_operand.vmem [shape: f32[32,8], index: 3, kind: input, shape index: {}]
  %s4 = inlined_call_operand.vmem [shape: f32[32,512], index: 4, kind: output, shape index: {0}]
  %s5 = inlined_call_operand.vmem [shape: f32[32,512], index: 5, kind: output, shape index: {1}]
  %s6 = inlined_call_operand.vmem [shape: f32[32,256], index: 6, kind: output, shape index: {2}]
  %7 = xla_tuple %s4, %s5, %s6
  %s8 = sld [smem:[#allocation0]]
  $region42: #{inception_forward.1} parent=0
    _
  %s10 = ssub.s32 1, %s8
  %s11 = scalar_select 0, %s10, %s8
  // Predicated region
  $region2: #{inception_forward.1} parent=0 // pred_check
    _
  $region3: #{inception_forward.1} parent=0 // pred_check_branch
    %13 = sbr.rel (0) target = $region5
  $region4: #{inception_forward.1} parent=0 // pred_region
    _
  $region5: #{inception_forward.1} parent=0 // pred_fallthru
    _
  // Predicated region
  $region6: #{inception_forward.1} parent=0 // pred_check
    _
  $region7: #{inception_forward.1} parent=0 // pred_check_branch
    %15 = sbr.rel (0) target = $region9
  $region8: #{inception_forward.1} parent=0 // pred_region
    _
  $region9: #{inception_forward.1} parent=0 // pred_fallthru
    _
  // Predicated region
  $region10: #{inception_forward.1} parent=0 // pred_check
    _
  $region11: #{inception_forward.1} parent=0 // pred_check_branch
    %17 = sbr.rel (0) target = $region13
  $region12: #{inception_forward.1} parent=0 // pred_region
    _
  $region13: #{inception_forward.1} parent=0 // pred_fallthru
    _
  // Predicated region
  $region14: #{inception_forward.1} parent=0 // pred_check
    _
  $region15: #{inception_forward.1} parent=0 // pred_check_branch
    %19 = sbr.rel (0) target = $region17
  $region16: #{inception_forward.1} parent=0 // pred_region
    _
  $region17: #{inception_forward.1} parent=0 // pred_fallthru
    _
  %v20 = vld [vmem:[%s0] sm:$0xff]
  %v21 = vld [vmem:[%s0 + $0x8] sm:$0xff]
  %v22 = vld [vmem:[%s0 + $0x10] sm:$0xff]
  %v23 = vld [vmem:[%s0 + $0x18] sm:$0xff]
  %v24 = vld [vmem:[%s2] sm:$0xff]
  %v25 = vld [vmem:[%s2 + $0x8] sm:$0xff]
  %v26 = vld [vmem:[%s2 + $0x10] sm:$0xff]
  %v27 = vld [vmem:[%s2 + $0x18] sm:$0xff]
  %v28 = vld [vmem:[%s2 + $0x20] sm:$0xff]
  %v29 = vld [vmem:[%s2 + $0x28] sm:$0xff]
  %v30 = vld [vmem:[%s2 + $0x30] sm:$0xff]
  %v31 = vld [vmem:[%s2 + $0x38] sm:$0xff]
  %v32 = vld [vmem:[%s2 + $0x40] sm:$0xff]
  %v33 = vld [vmem:[%s2 + $0x48] sm:$0xff]
  %v34 = vld [vmem:[%s2 + $0x50] sm:$0xff]
  %v35 = vld [vmem:[%s2 + $0x58] sm:$0xff]
  %v36 = vld [vmem:[%s2 + $0x60] sm:$0xff]
  %v37 = vld [vmem:[%s2 + $0x68] sm:$0xff]
  %v38 = vld [vmem:[%s2 + $0x70] sm:$0xff]
  %v39 = vld [vmem:[%s2 + $0x78] sm:$0xff]
  %v40 = vld [vmem:[%s2 + $0x80] sm:$0xff]
  %v41 = vld [vmem:[%s2 + $0x88] sm:$0xff]
  %v42 = vld [vmem:[%s2 + $0x90] sm:$0xff]
  %v43 = vld [vmem:[%s2 + $0x98] sm:$0xff]
  %v44 = vld [vmem:[%s2 + $0xa0] sm:$0xff]
  %v45 = vld [vmem:[%s2 + $0xa8] sm:$0xff]
  %v46 = vld [vmem:[%s2 + $0xb0] sm:$0xff]
  %v47 = vld [vmem:[%s2 + $0xb8] sm:$0xff]
  %v48 = vld [vmem:[%s2 + $0xc0] sm:$0xff]
  %v49 = vld [vmem:[%s2 + $0xc8] sm:$0xff]
  %v50 = vld [vmem:[%s2 + $0xd0] sm:$0xff]
  %v51 = vld [vmem:[%s2 + $0xd8] sm:$0xff]
  %v52 = vld [vmem:[%s2 + $0xe0] sm:$0xff]
  %v53 = vld [vmem:[%s2 + $0xe8] sm:$0xff]
  %v54 = vld [vmem:[%s2 + $0xf0] sm:$0xff]
  %v55 = vld [vmem:[%s2 + $0xf8] sm:$0xff]
  %vm56 = vcmask 64512
  %v58 = vsel %vm56, %v24, 0
  %v61 = vsel %vm56, %v25, 0
  %v64 = vsel %vm56, %v26, 0
  %v67 = vsel %vm56, %v27, 0
  %v70 = vsel %vm56, %v28, 0
  %v73 = vsel %vm56, %v29, 0
  %v76 = vsel %vm56, %v30, 0
  %v79 = vsel %vm56, %v31, 0
  %v82 = vsel %vm56, %v32, 0
  %v85 = vsel %vm56, %v33, 0
  %v88 = vsel %vm56, %v34, 0
  %v91 = vsel %vm56, %v35, 0
  %v94 = vsel %vm56, %v36, 0
  %v97 = vsel %vm56, %v37, 0
  %v100 = vsel %vm56, %v38, 0
  %v103 = vsel %vm56, %v39, 0
  %v106 = vsel %vm56, %v40, 0
  %v109 = vsel %vm56, %v41, 0
  %v112 = vsel %vm56, %v42, 0
  %v115 = vsel %vm56, %v43, 0
  %v118 = vsel %vm56, %v44, 0
  %v121 = vsel %vm56, %v45, 0
  %v124 = vsel %vm56, %v46, 0
  %v127 = vsel %vm56, %v47, 0
  %v130 = vsel %vm56, %v48, 0
  %v133 = vsel %vm56, %v49, 0
  %v136 = vsel %vm56, %v50, 0
  %v139 = vsel %vm56, %v51, 0
  %v142 = vsel %vm56, %v52, 0
  %v145 = vsel %vm56, %v53, 0
  %v148 = vsel %vm56, %v54, 0
  %v151 = vsel %vm56, %v55, 0
  %153 = vmatprep.subr.mxu0 0.0
  %154 = vmatpush1.msra.mxu0 0.0
  %155 = vmatprep.subr.mxu0 0.0
  %156 = vmatpush1.msra.mxu0 0.0
  %157 = vmatprep.subr.mxu0 0.0
  %158 = vmatpush1.msra.mxu0 0.0
  %159 = vmatprep.subr.mxu0 0.0
  %160 = vmatpush1.msra.mxu0 0.0
  %161 = vmatprep.subr.mxu0 0.0
  %162 = vmatpush1.msra.mxu0 0.0
  %163 = vmatprep.subr.mxu0 0.0
  %164 = vmatpush1.msra.mxu0 0.0
  %165 = vmatprep.subr.mxu0 0.0
  %166 = vmatpush1.msra.mxu0 0.0
  %167 = vmatprep.subr.mxu0 0.0
  %168 = vmatpush1.msra.mxu0 0.0
  %169 = vmatprep.subr.mxu0 0.0
  %170 = vmatpush1.msra.mxu0 0.0
  %171 = vmatprep.subr.mxu0 0.0
  %172 = vmatpush1.msra.mxu0 0.0
  %173 = vmatprep.subr.mxu0 0.0
  %174 = vmatpush1.msra.mxu0 0.0
  %175 = vmatprep.subr.mxu0 0.0
  %176 = vmatpush1.msra.mxu0 0.0
  %177 = vmatprep.subr.mxu0 0.0
  %178 = vmatpush1.msra.mxu0 0.0
  %179 = vmatprep.subr.mxu0 0.0
  %180 = vmatpush1.msra.mxu0 0.0
  %181 = vmatprep.subr.mxu0 0.0
  %182 = vmatpush1.msra.mxu0 0.0
  %183 = vmatprep.subr.mxu0 %v21
  %184 = vmatpush1.msra.mxu0 %v20
  %185 = vmatprep.subr.mxu0 0.0
  %186 = vmatpush2.msra.mxu0 0.0
  %187 = vmatprep.subr.mxu0 0.0
  %188 = vmatpush2.msra.mxu0 0.0
  %189 = vmatprep.subr.mxu0 0.0
  %190 = vmatpush2.msra.mxu0 0.0
  %191 = vmatprep.subr.mxu0 0.0
  %192 = vmatpush2.msra.mxu0 0.0
  %193 = vmatprep.subr.mxu0 0.0
  %194 = vmatpush2.msra.mxu0 0.0
  %195 = vmatprep.subr.mxu0 0.0
  %196 = vmatpush2.msra.mxu0 0.0
  %197 = vmatprep.subr.mxu0 0.0
  %198 = vmatpush2.msra.mxu0 0.0
  %199 = vmatprep.subr.mxu0 0.0
  %200 = vmatpush2.msra.mxu0 0.0
  %201 = vmatprep.subr.mxu0 0.0
  %202 = vmatpush2.msra.mxu0 0.0
  %203 = vmatprep.subr.mxu0 0.0
  %204 = vmatpush2.msra.mxu0 0.0
  %205 = vmatprep.subr.mxu0 0.0
  %206 = vmatpush2.msra.mxu0 0.0
  %207 = vmatprep.subr.mxu0 0.0
  %208 = vmatpush2.msra.mxu0 0.0
  %209 = vmatprep.subr.mxu0 0.0
  %210 = vmatpush2.msra.mxu0 0.0
  %211 = vmatprep.subr.mxu0 0.0
  %212 = vmatpush2.msra.mxu0 0.0
  %213 = vmatprep.subr.mxu0 0.0
  %214 = vmatpush2.msra.mxu0 0.0
  %215 = vmatprep.subr.mxu0 0.0
  %216 = vmatpush2.msra.mxu0 0.0
  %217 = vmatprep.mubr.f32.mxu0 0.0
  %218 = vmatmul.mubr.f32.gmra.mxu0 %v58
  %v219 = vpop.f32.mrf.mxu0
  %v220 = vadd.f32 0.0, %v219
  %v221 = vpop.f32.mrf.mxu0
  %v222 = vadd.f32 0.0, %v221
  %223 = vmatprep.mubr.f32.mxu0 0.0
  %224 = vmatmul.mubr.f32.gmra.mxu0 %v61
  %v225 = vpop.f32.mrf.mxu0
  %v226 = vadd.f32 0.0, %v225
  %v227 = vpop.f32.mrf.mxu0
  %v228 = vadd.f32 0.0, %v227
  %229 = vmatprep.mubr.f32.mxu0 0.0
  %230 = vmatmul.mubr.f32.gmra.mxu0 %v64
  %v231 = vpop.f32.mrf.mxu0
  %v232 = vadd.f32 0.0, %v231
  %v233 = vpop.f32.mrf.mxu0
  %v234 = vadd.f32 0.0, %v233
  %235 = vmatprep.mubr.f32.mxu0 0.0
  %236 = vmatmul.mubr.f32.gmra.mxu0 %v67
  %v237 = vpop.f32.mrf.mxu0
  %v238 = vadd.f32 0.0, %v237
  %v239 = vpop.f32.mrf.mxu0
  %v240 = vadd.f32 0.0, %v239
  %241 = vmatprep.mubr.f32.mxu0 0.0
  %242 = vmatmul.mubr.f32.gmra.mxu0 %v70
  %v243 = vpop.f32.mrf.mxu0
  %v244 = vadd.f32 0.0, %v243
  %v245 = vpop.f32.mrf.mxu0
  %v246 = vadd.f32 0.0, %v245
  %247 = vmatprep.mubr.f32.mxu0 0.0
  %248 = vmatmul.mubr.f32.gmra.mxu0 %v73
  %v249 = vpop.f32.mrf.mxu0
  %v250 = vadd.f32 0.0, %v249
  %v251 = vpop.f32.mrf.mxu0
  %v252 = vadd.f32 0.0, %v251
  %253 = vmatprep.mubr.f32.mxu0 0.0
  %254 = vmatmul.mubr.f32.gmra.mxu0 %v76
  %v255 = vpop.f32.mrf.mxu0
  %v256 = vadd.f32 0.0, %v255
  %v257 = vpop.f32.mrf.mxu0
  %v258 = vadd.f32 0.0, %v257
  %259 = vmatprep.mubr.f32.mxu0 0.0
  %260 = vmatmul.mubr.f32.gmra.mxu0 %v79
  %v261 = vpop.f32.mrf.mxu0
  %v262 = vadd.f32 0.0, %v261
  %v263 = vpop.f32.mrf.mxu0
  %v264 = vadd.f32 0.0, %v263
  %265 = vmatprep.mubr.f32.mxu0 0.0
  %266 = vmatmul.mubr.f32.gmra.mxu0 %v82
  %v267 = vpop.f32.mrf.mxu0
  %v268 = vadd.f32 0.0, %v267
  %v269 = vpop.f32.mrf.mxu0
  %v270 = vadd.f32 0.0, %v269
  %271 = vmatprep.mubr.f32.mxu0 0.0
  %272 = vmatmul.mubr.f32.gmra.mxu0 %v85
  %v273 = vpop.f32.mrf.mxu0
  %v274 = vadd.f32 0.0, %v273
  %v275 = vpop.f32.mrf.mxu0
  %v276 = vadd.f32 0.0, %v275
  %277 = vmatprep.mubr.f32.mxu0 0.0
  %278 = vmatmul.mubr.f32.gmra.mxu0 %v88
  %v279 = vpop.f32.mrf.mxu0
  %v280 = vadd.f32 0.0, %v279
  %v281 = vpop.f32.mrf.mxu0
  %v282 = vadd.f32 0.0, %v281
  %283 = vmatprep.mubr.f32.mxu0 0.0
  %284 = vmatmul.mubr.f32.gmra.mxu0 %v91
  %v285 = vpop.f32.mrf.mxu0
  %v286 = vadd.f32 0.0, %v285
  %v287 = vpop.f32.mrf.mxu0
  %v288 = vadd.f32 0.0, %v287
  %289 = vmatprep.mubr.f32.mxu0 0.0
  %290 = vmatmul.mubr.f32.gmra.mxu0 %v94
  %v291 = vpop.f32.mrf.mxu0
  %v292 = vadd.f32 0.0, %v291
  %v293 = vpop.f32.mrf.mxu0
  %v294 = vadd.f32 0.0, %v293
  %295 = vmatprep.mubr.f32.mxu0 0.0
  %296 = vmatmul.mubr.f32.gmra.mxu0 %v97
  %v297 = vpop.f32.mrf.mxu0
  %v298 = vadd.f32 0.0, %v297
  %v299 = vpop.f32.mrf.mxu0
  %v300 = vadd.f32 0.0, %v299
  %301 = vmatprep.mubr.f32.mxu0 0.0
  %302 = vmatmul.mubr.f32.gmra.mxu0 %v100
  %v303 = vpop.f32.mrf.mxu0
  %v304 = vadd.f32 0.0, %v303
  %v305 = vpop.f32.mrf.mxu0
  %v306 = vadd.f32 0.0, %v305
  %307 = vmatprep.mubr.f32.mxu0 0.0
  %308 = vmatmul.mubr.f32.gmra.mxu0 %v103
  %v309 = vpop.f32.mrf.mxu0
  %v310 = vadd.f32 0.0, %v309
  %v311 = vpop.f32.mrf.mxu0
  %v312 = vadd.f32 0.0, %v311
  %313 = vmatprep.mubr.f32.mxu0 0.0
  %314 = vmatmul.mubr.f32.gmra.mxu0 %v106
  %v315 = vpop.f32.mrf.mxu0
  %v316 = vadd.f32 0.0, %v315
  %v317 = vpop.f32.mrf.mxu0
  %v318 = vadd.f32 0.0, %v317
  %319 = vmatprep.mubr.f32.mxu0 0.0
  %320 = vmatmul.mubr.f32.gmra.mxu0 %v109
  %v321 = vpop.f32.mrf.mxu0
  %v322 = vadd.f32 0.0, %v321
  %v323 = vpop.f32.mrf.mxu0
  %v324 = vadd.f32 0.0, %v323
  %325 = vmatprep.mubr.f32.mxu0 0.0
  %326 = vmatmul.mubr.f32.gmra.mxu0 %v112
  %v327 = vpop.f32.mrf.mxu0
  %v328 = vadd.f32 0.0, %v327
  %v329 = vpop.f32.mrf.mxu0
  %v330 = vadd.f32 0.0, %v329
  %331 = vmatprep.mubr.f32.mxu0 0.0
  %332 = vmatmul.mubr.f32.gmra.mxu0 %v115
  %v333 = vpop.f32.mrf.mxu0
  %v334 = vadd.f32 0.0, %v333
  %v335 = vpop.f32.mrf.mxu0
  %v336 = vadd.f32 0.0, %v335
  %337 = vmatprep.mubr.f32.mxu0 0.0
  %338 = vmatmul.mubr.f32.gmra.mxu0 %v118
  %v339 = vpop.f32.mrf.mxu0
  %v340 = vadd.f32 0.0, %v339
  %v341 = vpop.f32.mrf.mxu0
  %v342 = vadd.f32 0.0, %v341
  %343 = vmatprep.mubr.f32.mxu0 0.0
  %344 = vmatmul.mubr.f32.gmra.mxu0 %v121
  %v345 = vpop.f32.mrf.mxu0
  %v346 = vadd.f32 0.0, %v345
  %v347 = vpop.f32.mrf.mxu0
  %v348 = vadd.f32 0.0, %v347
  %349 = vmatprep.mubr.f32.mxu0 0.0
  %350 = vmatmul.mubr.f32.gmra.mxu0 %v124
  %v351 = vpop.f32.mrf.mxu0
  %v352 = vadd.f32 0.0, %v351
  %v353 = vpop.f32.mrf.mxu0
  %v354 = vadd.f32 0.0, %v353
  %355 = vmatprep.mubr.f32.mxu0 0.0
  %356 = vmatmul.mubr.f32.gmra.mxu0 %v127
  %v357 = vpop.f32.mrf.mxu0
  %v358 = vadd.f32 0.0, %v357
  %v359 = vpop.f32.mrf.mxu0
  %v360 = vadd.f32 0.0, %v359
  %361 = vmatprep.mubr.f32.mxu0 0.0
  %362 = vmatmul.mubr.f32.gmra.mxu0 %v130
  %v363 = vpop.f32.mrf.mxu0
  %v364 = vadd.f32 0.0, %v363
  %v365 = vpop.f32.mrf.mxu0
  %v366 = vadd.f32 0.0, %v365
  %367 = vmatprep.mubr.f32.mxu0 0.0
  %368 = vmatmul.mubr.f32.gmra.mxu0 %v133
  %v369 = vpop.f32.mrf.mxu0
  %v370 = vadd.f32 0.0, %v369
  %v371 = vpop.f32.mrf.mxu0
  %v372 = vadd.f32 0.0, %v371
  %373 = vmatprep.mubr.f32.mxu0 0.0
  %374 = vmatmul.mubr.f32.gmra.mxu0 %v136
  %v375 = vpop.f32.mrf.mxu0
  %v376 = vadd.f32 0.0, %v375
  %v377 = vpop.f32.mrf.mxu0
  %v378 = vadd.f32 0.0, %v377
  %379 = vmatprep.mubr.f32.mxu0 0.0
  %380 = vmatmul.mubr.f32.gmra.mxu0 %v139
  %v381 = vpop.f32.mrf.mxu0
  %v382 = vadd.f32 0.0, %v381
  %v383 = vpop.f32.mrf.mxu0
  %v384 = vadd.f32 0.0, %v383
  %385 = vmatprep.mubr.f32.mxu0 0.0
  %386 = vmatmul.mubr.f32.gmra.mxu0 %v142
  %v387 = vpop.f32.mrf.mxu0
  %v388 = vadd.f32 0.0, %v387
  %v389 = vpop.f32.mrf.mxu0
  %v390 = vadd.f32 0.0, %v389
  %391 = vmatprep.mubr.f32.mxu0 0.0
  %392 = vmatmul.mubr.f32.gmra.mxu0 %v145
  %v393 = vpop.f32.mrf.mxu0
  %v394 = vadd.f32 0.0, %v393
  %v395 = vpop.f32.mrf.mxu0
  %v396 = vadd.f32 0.0, %v395
  %397 = vmatprep.mubr.f32.mxu0 0.0
  %398 = vmatmul.mubr.f32.gmra.mxu0 %v148
  %v399 = vpop.f32.mrf.mxu0
  %v400 = vadd.f32 0.0, %v399
  %v401 = vpop.f32.mrf.mxu0
  %v402 = vadd.f32 0.0, %v401
  %403 = vmatprep.mubr.f32.mxu0 0.0
  %404 = vmatmul.mubr.f32.gmra.mxu0 %v151
  %v405 = vpop.f32.mrf.mxu0
  %v406 = vadd.f32 0.0, %v405
  %v407 = vpop.f32.mrf.mxu0
  %v408 = vadd.f32 0.0, %v407
  %409 = vdwg.mxu0
  %410 = vmatprep.subr.mxu0 0.0
  %411 = vmatpush1.msra.mxu0 0.0
  %412 = vmatprep.subr.mxu0 0.0
  %413 = vmatpush1.msra.mxu0 0.0
  %414 = vmatprep.subr.mxu0 0.0
  %415 = vmatpush1.msra.mxu0 0.0
  %416 = vmatprep.subr.mxu0 0.0
  %417 = vmatpush1.msra.mxu0 0.0
  %418 = vmatprep.subr.mxu0 0.0
  %419 = vmatpush1.msra.mxu0 0.0
  %420 = vmatprep.subr.mxu0 0.0
  %421 = vmatpush1.msra.mxu0 0.0
  %422 = vmatprep.subr.mxu0 0.0
  %423 = vmatpush1.msra.mxu0 0.0
  %424 = vmatprep.subr.mxu0 0.0
  %425 = vmatpush1.msra.mxu0 0.0
  %426 = vmatprep.subr.mxu0 0.0
  %427 = vmatpush1.msra.mxu0 0.0
  %428 = vmatprep.subr.mxu0 0.0
  %429 = vmatpush1.msra.mxu0 0.0
  %430 = vmatprep.subr.mxu0 0.0
  %431 = vmatpush1.msra.mxu0 0.0
  %432 = vmatprep.subr.mxu0 0.0
  %433 = vmatpush1.msra.mxu0 0.0
  %434 = vmatprep.subr.mxu0 0.0
  %435 = vmatpush1.msra.mxu0 0.0
  %436 = vmatprep.subr.mxu0 0.0
  %437 = vmatpush1.msra.mxu0 0.0
  %438 = vmatprep.subr.mxu0 0.0
  %439 = vmatpush1.msra.mxu0 0.0
  %440 = vmatprep.subr.mxu0 %v23
  %441 = vmatpush1.msra.mxu0 %v22
  %442 = vmatprep.subr.mxu0 0.0
  %443 = vmatpush2.msra.mxu0 0.0
  %444 = vmatprep.subr.mxu0 0.0
  %445 = vmatpush2.msra.mxu0 0.0
  %446 = vmatprep.subr.mxu0 0.0
  %447 = vmatpush2.msra.mxu0 0.0
  %448 = vmatprep.subr.mxu0 0.0
  %449 = vmatpush2.msra.mxu0 0.0
  %450 = vmatprep.subr.mxu0 0.0
  %451 = vmatpush2.msra.mxu0 0.0
  %452 = vmatprep.subr.mxu0 0.0
  %453 = vmatpush2.msra.mxu0 0.0
  %454 = vmatprep.subr.mxu0 0.0
  %455 = vmatpush2.msra.mxu0 0.0
  %456 = vmatprep.subr.mxu0 0.0
  %457 = vmatpush2.msra.mxu0 0.0
  %458 = vmatprep.subr.mxu0 0.0
  %459 = vmatpush2.msra.mxu0 0.0
  %460 = vmatprep.subr.mxu0 0.0
  %461 = vmatpush2.msra.mxu0 0.0
  %462 = vmatprep.subr.mxu0 0.0
  %463 = vmatpush2.msra.mxu0 0.0
  %464 = vmatprep.subr.mxu0 0.0
  %465 = vmatpush2.msra.mxu0 0.0
  %466 = vmatprep.subr.mxu0 0.0
  %467 = vmatpush2.msra.mxu0 0.0
  %468 = vmatprep.subr.mxu0 0.0
  %469 = vmatpush2.msra.mxu0 0.0
  %470 = vmatprep.subr.mxu0 0.0
  %471 = vmatpush2.msra.mxu0 0.0
  %472 = vmatprep.subr.mxu0 0.0
  %473 = vmatpush2.msra.mxu0 0.0
  %474 = vmatprep.mubr.f32.mxu0 0.0
  %475 = vmatmul.mubr.f32.gmra.mxu0 %v58
  %v476 = vpop.f32.mrf.mxu0
  %v477 = vadd.f32 0.0, %v476
  %v478 = vpop.f32.mrf.mxu0
  %v479 = vadd.f32 0.0, %v478
  %480 = vmatprep.mubr.f32.mxu0 0.0
  %481 = vmatmul.mubr.f32.gmra.mxu0 %v61
  %v482 = vpop.f32.mrf.mxu0
  %v483 = vadd.f32 0.0, %v482
  %v484 = vpop.f32.mrf.mxu0
  %v485 = vadd.f32 0.0, %v484
  %486 = vmatprep.mubr.f32.mxu0 0.0
  %487 = vmatmul.mubr.f32.gmra.mxu0 %v64
  %v488 = vpop.f32.mrf.mxu0
  %v489 = vadd.f32 0.0, %v488
  %v490 = vpop.f32.mrf.mxu0
  %v491 = vadd.f32 0.0, %v490
  %492 = vmatprep.mubr.f32.mxu0 0.0
  %493 = vmatmul.mubr.f32.gmra.mxu0 %v67
  %v494 = vpop.f32.mrf.mxu0
  %v495 = vadd.f32 0.0, %v494
  %v496 = vpop.f32.mrf.mxu0
  %v497 = vadd.f32 0.0, %v496
  %498 = vmatprep.mubr.f32.mxu0 0.0
  %499 = vmatmul.mubr.f32.gmra.mxu0 %v70
  %v500 = vpop.f32.mrf.mxu0
  %v501 = vadd.f32 0.0, %v500
  %v502 = vpop.f32.mrf.mxu0
  %v503 = vadd.f32 0.0, %v502
  %504 = vmatprep.mubr.f32.mxu0 0.0
  %505 = vmatmul.mubr.f32.gmra.mxu0 %v73
  %v506 = vpop.f32.mrf.mxu0
  %v507 = vadd.f32 0.0, %v506
  %v508 = vpop.f32.mrf.mxu0
  %v509 = vadd.f32 0.0, %v508
  %510 = vmatprep.mubr.f32.mxu0 0.0
  %511 = vmatmul.mubr.f32.gmra.mxu0 %v76
  %v512 = vpop.f32.mrf.mxu0
  %v513 = vadd.f32 0.0, %v512
  %v514 = vpop.f32.mrf.mxu0
  %v515 = vadd.f32 0.0, %v514
  %516 = vmatprep.mubr.f32.mxu0 0.0
  %517 = vmatmul.mubr.f32.gmra.mxu0 %v79
  %v518 = vpop.f32.mrf.mxu0
  %v519 = vadd.f32 0.0, %v518
  %v520 = vpop.f32.mrf.mxu0
  %v521 = vadd.f32 0.0, %v520
  %522 = vmatprep.mubr.f32.mxu0 0.0
  %523 = vmatmul.mubr.f32.gmra.mxu0 %v82
  %v524 = vpop.f32.mrf.mxu0
  %v525 = vadd.f32 0.0, %v524
  %v526 = vpop.f32.mrf.mxu0
  %v527 = vadd.f32 0.0, %v526
  %528 = vmatprep.mubr.f32.mxu0 0.0
  %529 = vmatmul.mubr.f32.gmra.mxu0 %v85
  %v530 = vpop.f32.mrf.mxu0
  %v531 = vadd.f32 0.0, %v530
  %v532 = vpop.f32.mrf.mxu0
  %v533 = vadd.f32 0.0, %v532
  %534 = vmatprep.mubr.f32.mxu0 0.0
  %535 = vmatmul.mubr.f32.gmra.mxu0 %v88
  %v536 = vpop.f32.mrf.mxu0
  %v537 = vadd.f32 0.0, %v536
  %v538 = vpop.f32.mrf.mxu0
  %v539 = vadd.f32 0.0, %v538
  %540 = vmatprep.mubr.f32.mxu0 0.0
  %541 = vmatmul.mubr.f32.gmra.mxu0 %v91
  %v542 = vpop.f32.mrf.mxu0
  %v543 = vadd.f32 0.0, %v542
  %v544 = vpop.f32.mrf.mxu0
  %v545 = vadd.f32 0.0, %v544
  %546 = vmatprep.mubr.f32.mxu0 0.0
  %547 = vmatmul.mubr.f32.gmra.mxu0 %v94
  %v548 = vpop.f32.mrf.mxu0
  %v549 = vadd.f32 0.0, %v548
  %v550 = vpop.f32.mrf.mxu0
  %v551 = vadd.f32 0.0, %v550
  %552 = vmatprep.mubr.f32.mxu0 0.0
  %553 = vmatmul.mubr.f32.gmra.mxu0 %v97
  %v554 = vpop.f32.mrf.mxu0
  %v555 = vadd.f32 0.0, %v554
  %v556 = vpop.f32.mrf.mxu0
  %v557 = vadd.f32 0.0, %v556
  %558 = vmatprep.mubr.f32.mxu0 0.0
  %559 = vmatmul.mubr.f32.gmra.mxu0 %v100
  %v560 = vpop.f32.mrf.mxu0
  %v561 = vadd.f32 0.0, %v560
  %v562 = vpop.f32.mrf.mxu0
  %v563 = vadd.f32 0.0, %v562
  %564 = vmatprep.mubr.f32.mxu0 0.0
  %565 = vmatmul.mubr.f32.gmra.mxu0 %v103
  %v566 = vpop.f32.mrf.mxu0
  %v567 = vadd.f32 0.0, %v566
  %v568 = vpop.f32.mrf.mxu0
  %v569 = vadd.f32 0.0, %v568
  %570 = vmatprep.mubr.f32.mxu0 0.0
  %571 = vmatmul.mubr.f32.gmra.mxu0 %v106
  %v572 = vpop.f32.mrf.mxu0
  %v573 = vadd.f32 0.0, %v572
  %v574 = vpop.f32.mrf.mxu0
  %v575 = vadd.f32 0.0, %v574
  %576 = vmatprep.mubr.f32.mxu0 0.0
  %577 = vmatmul.mubr.f32.gmra.mxu0 %v109
  %v578 = vpop.f32.mrf.mxu0
  %v579 = vadd.f32 0.0, %v578
  %v580 = vpop.f32.mrf.mxu0
  %v581 = vadd.f32 0.0, %v580
  %582 = vmatprep.mubr.f32.mxu0 0.0
  %583 = vmatmul.mubr.f32.gmra.mxu0 %v112
  %v584 = vpop.f32.mrf.mxu0
  %v585 = vadd.f32 0.0, %v584
  %v586 = vpop.f32.mrf.mxu0
  %v587 = vadd.f32 0.0, %v586
  %588 = vmatprep.mubr.f32.mxu0 0.0
  %589 = vmatmul.mubr.f32.gmra.mxu0 %v115
  %v590 = vpop.f32.mrf.mxu0
  %v591 = vadd.f32 0.0, %v590
  %v592 = vpop.f32.mrf.mxu0
  %v593 = vadd.f32 0.0, %v592
  %594 = vmatprep.mubr.f32.mxu0 0.0
  %595 = vmatmul.mubr.f32.gmra.mxu0 %v118
  %v596 = vpop.f32.mrf.mxu0
  %v597 = vadd.f32 0.0, %v596
  %v598 = vpop.f32.mrf.mxu0
  %v599 = vadd.f32 0.0, %v598
  %600 = vmatprep.mubr.f32.mxu0 0.0
  %601 = vmatmul.mubr.f32.gmra.mxu0 %v121
  %v602 = vpop.f32.mrf.mxu0
  %v603 = vadd.f32 0.0, %v602
  %v604 = vpop.f32.mrf.mxu0
  %v605 = vadd.f32 0.0, %v604
  %606 = vmatprep.mubr.f32.mxu0 0.0
  %607 = vmatmul.mubr.f32.gmra.mxu0 %v124
  %v608 = vpop.f32.mrf.mxu0
  %v609 = vadd.f32 0.0, %v608
  %v610 = vpop.f32.mrf.mxu0
  %v611 = vadd.f32 0.0, %v610
  %612 = vmatprep.mubr.f32.mxu0 0.0
  %613 = vmatmul.mubr.f32.gmra.mxu0 %v127
  %v614 = vpop.f32.mrf.mxu0
  %v615 = vadd.f32 0.0, %v614
  %v616 = vpop.f32.mrf.mxu0
  %v617 = vadd.f32 0.0, %v616
  %618 = vmatprep.mubr.f32.mxu0 0.0
  %619 = vmatmul.mubr.f32.gmra.mxu0 %v130
  %v620 = vpop.f32.mrf.mxu0
  %v621 = vadd.f32 0.0, %v620
  %v622 = vpop.f32.mrf.mxu0
  %v623 = vadd.f32 0.0, %v622
  %624 = vmatprep.mubr.f32.mxu0 0.0
  %625 = vmatmul.mubr.f32.gmra.mxu0 %v133
  %v626 = vpop.f32.mrf.mxu0
  %v627 = vadd.f32 0.0, %v626
  %v628 = vpop.f32.mrf.mxu0
  %v629 = vadd.f32 0.0, %v628
  %630 = vmatprep.mubr.f32.mxu0 0.0
  %631 = vmatmul.mubr.f32.gmra.mxu0 %v136
  %v632 = vpop.f32.mrf.mxu0
  %v633 = vadd.f32 0.0, %v632
  %v634 = vpop.f32.mrf.mxu0
  %v635 = vadd.f32 0.0, %v634
  %636 = vmatprep.mubr.f32.mxu0 0.0
  %637 = vmatmul.mubr.f32.gmra.mxu0 %v139
  %v638 = vpop.f32.mrf.mxu0
  %v639 = vadd.f32 0.0, %v638
  %v640 = vpop.f32.mrf.mxu0
  %v641 = vadd.f32 0.0, %v640
  %642 = vmatprep.mubr.f32.mxu0 0.0
  %643 = vmatmul.mubr.f32.gmra.mxu0 %v142
  %v644 = vpop.f32.mrf.mxu0
  %v645 = vadd.f32 0.0, %v644
  %v646 = vpop.f32.mrf.mxu0
  %v647 = vadd.f32 0.0, %v646
  %648 = vmatprep.mubr.f32.mxu0 0.0
  %649 = vmatmul.mubr.f32.gmra.mxu0 %v145
  %v650 = vpop.f32.mrf.mxu0
  %v651 = vadd.f32 0.0, %v650
  %v652 = vpop.f32.mrf.mxu0
  %v653 = vadd.f32 0.0, %v652
  %654 = vmatprep.mubr.f32.mxu0 0.0
  %655 = vmatmul.mubr.f32.gmra.mxu0 %v148
  %v656 = vpop.f32.mrf.mxu0
  %v657 = vadd.f32 0.0, %v656
  %v658 = vpop.f32.mrf.mxu0
  %v659 = vadd.f32 0.0, %v658
  %660 = vmatprep.mubr.f32.mxu0 0.0
  %661 = vmatmul.mubr.f32.gmra.mxu0 %v151
  %v662 = vpop.f32.mrf.mxu0
  %v663 = vadd.f32 0.0, %v662
  %v664 = vpop.f32.mrf.mxu0
  %v665 = vadd.f32 0.0, %v664
  %666 = vdwg.mxu0
  %667 = vrot.lane.b32.xlu0 %v244, 112
  %v668 = vpop.permute.xlu0 %667
  %669 = vrot.lane.b32.xlu0 %v250, 112
  %v670 = vpop.permute.xlu0 %669
  %671 = vrot.lane.b32.xlu0 %v256, 112
  %v672 = vpop.permute.xlu0 %671
  %673 = vrot.lane.b32.xlu0 %v262, 112
  %v674 = vpop.permute.xlu0 %673
  %675 = vrot.lane.b32.xlu0 %v246, 112
  %v676 = vpop.permute.xlu0 %675
  %677 = vrot.lane.b32.xlu0 %v252, 112
  %v678 = vpop.permute.xlu0 %677
  %679 = vrot.lane.b32.xlu0 %v258, 112
  %v680 = vpop.permute.xlu0 %679
  %681 = vrot.lane.b32.xlu0 %v264, 112
  %v682 = vpop.permute.xlu0 %681
  %683 = vrot.lane.b32.xlu0 %v501, 112
  %v684 = vpop.permute.xlu0 %683
  %685 = vrot.lane.b32.xlu0 %v507, 112
  %v686 = vpop.permute.xlu0 %685
  %687 = vrot.lane.b32.xlu0 %v513, 112
  %v688 = vpop.permute.xlu0 %687
  %689 = vrot.lane.b32.xlu0 %v519, 112
  %v690 = vpop.permute.xlu0 %689
  %691 = vrot.lane.b32.xlu0 %v503, 112
  %v692 = vpop.permute.xlu0 %691
  %693 = vrot.lane.b32.xlu0 %v509, 112
  %v694 = vpop.permute.xlu0 %693
  %695 = vrot.lane.b32.xlu0 %v515, 112
  %v696 = vpop.permute.xlu0 %695
  %697 = vrot.lane.b32.xlu0 %v521, 112
  %v698 = vpop.permute.xlu0 %697
  %v699 = vlaneseq
  %v700 = vand.u32 %v699, 127
  %vm701 = vcmp.lt.s32.totalorder %v700, 112
  %v702 = vsel %vm701, %v684, %v692
  %v703 = vsel %vm701, %v686, %v694
  %v704 = vsel %vm701, %v688, %v696
  %v705 = vsel %vm701, %v690, %v698
  %v706 = vsel %vm701, %v676, %v684
  %v707 = vsel %vm701, %v678, %v686
  %v708 = vsel %vm701, %v680, %v688
  %v709 = vsel %vm701, %v682, %v690
  %v710 = vsel %vm701, %v668, %v676
  %v711 = vsel %vm701, %v670, %v678
  %v712 = vsel %vm701, %v672, %v680
  %v713 = vsel %vm701, %v674, %v682
  %v714 = vsel %vm701, %v692, %v668
  %v715 = vsel %vm701, %v694, %v670
  %v716 = vsel %vm701, %v696, %v672
  %v717 = vsel %vm701, %v698, %v674
  %v718 = vadd.f32 %v220, %v710
  %v719 = vadd.f32 %v222, %v706
  %v720 = vadd.f32 %v477, %v702
  %v721 = vadd.f32 %v479, %v714
  %v722 = vadd.f32 %v226, %v711
  %v723 = vadd.f32 %v228, %v707
  %v724 = vadd.f32 %v483, %v703
  %v725 = vadd.f32 %v485, %v715
  %v726 = vadd.f32 %v232, %v712
  %v727 = vadd.f32 %v234, %v708
  %v728 = vadd.f32 %v489, %v704
  %v729 = vadd.f32 %v491, %v716
  %v730 = vadd.f32 %v238, %v713
  %v731 = vadd.f32 %v240, %v709
  %v732 = vadd.f32 %v495, %v705
  %v733 = vadd.f32 %v497, %v717
  %734 = vrot.lane.b32.xlu0 %v268, 96
  %v735 = vpop.permute.xlu0 %734
  %736 = vrot.lane.b32.xlu0 %v274, 96
  %v737 = vpop.permute.xlu0 %736
  %738 = vrot.lane.b32.xlu0 %v280, 96
  %v739 = vpop.permute.xlu0 %738
  %740 = vrot.lane.b32.xlu0 %v286, 96
  %v741 = vpop.permute.xlu0 %740
  %742 = vrot.lane.b32.xlu0 %v270, 96
  %v743 = vpop.permute.xlu0 %742
  %744 = vrot.lane.b32.xlu0 %v276, 96
  %v745 = vpop.permute.xlu0 %744
  %746 = vrot.lane.b32.xlu0 %v282, 96
  %v747 = vpop.permute.xlu0 %746
  %748 = vrot.lane.b32.xlu0 %v288, 96
  %v749 = vpop.permute.xlu0 %748
  %750 = vrot.lane.b32.xlu0 %v525, 96
  %v751 = vpop.permute.xlu0 %750
  %752 = vrot.lane.b32.xlu0 %v531, 96
  %v753 = vpop.permute.xlu0 %752
  %754 = vrot.lane.b32.xlu0 %v537, 96
  %v755 = vpop.permute.xlu0 %754
  %756 = vrot.lane.b32.xlu0 %v543, 96
  %v757 = vpop.permute.xlu0 %756
  %758 = vrot.lane.b32.xlu0 %v527, 96
  %v759 = vpop.permute.xlu0 %758
  %760 = vrot.lane.b32.xlu0 %v533, 96
  %v761 = vpop.permute.xlu0 %760
  %762 = vrot.lane.b32.xlu0 %v539, 96
  %v763 = vpop.permute.xlu0 %762
  %764 = vrot.lane.b32.xlu0 %v545, 96
  %v765 = vpop.permute.xlu0 %764
  %vm766 = vcmp.lt.s32.totalorder %v700, 96
  %v767 = vsel %vm766, %v751, %v759
  %v768 = vsel %vm766, %v753, %v761
  %v769 = vsel %vm766, %v755, %v763
  %v770 = vsel %vm766, %v757, %v765
  %v771 = vsel %vm766, %v743, %v751
  %v772 = vsel %vm766, %v745, %v753
  %v773 = vsel %vm766, %v747, %v755
  %v774 = vsel %vm766, %v749, %v757
  %v775 = vsel %vm766, %v735, %v743
  %v776 = vsel %vm766, %v737, %v745
  %v777 = vsel %vm766, %v739, %v747
  %v778 = vsel %vm766, %v741, %v749
  %v779 = vsel %vm766, %v759, %v735
  %v780 = vsel %vm766, %v761, %v737
  %v781 = vsel %vm766, %v763, %v739
  %v782 = vsel %vm766, %v765, %v741
  %v783 = vadd.f32 %v718, %v775
  %v784 = vadd.f32 %v719, %v771
  %v785 = vadd.f32 %v720, %v767
  %v786 = vadd.f32 %v721, %v779
  %v787 = vadd.f32 %v722, %v776
  %v788 = vadd.f32 %v723, %v772
  %v789 = vadd.f32 %v724, %v768
  %v790 = vadd.f32 %v725, %v780
  %v791 = vadd.f32 %v726, %v777
  %v792 = vadd.f32 %v727, %v773
  %v793 = vadd.f32 %v728, %v769
  %v794 = vadd.f32 %v729, %v781
  %v795 = vadd.f32 %v730, %v778
  %v796 = vadd.f32 %v731, %v774
  %v797 = vadd.f32 %v732, %v770
  %v798 = vadd.f32 %v733, %v782
  %799 = vst [vmem:[%s4] sm:$0xff] %v783
  %800 = vst [vmem:[%s4 + $0x8] sm:$0xff] %v784
  %801 = vst [vmem:[%s4 + $0x10] sm:$0xff] %v785
  %802 = vst [vmem:[%s4 + $0x18] sm:$0xff] %v786
  %803 = vst [vmem:[%s4 + $0x20] sm:$0xff] %v787
  %804 = vst [vmem:[%s4 + $0x28] sm:$0xff] %v788
  %805 = vst [vmem:[%s4 + $0x30] sm:$0xff] %v789
  %806 = vst [vmem:[%s4 + $0x38] sm:$0xff] %v790
  %807 = vst [vmem:[%s4 + $0x40] sm:$0xff] %v791
  %808 = vst [vmem:[%s4 + $0x48] sm:$0xff] %v792
  %809 = vst [vmem:[%s4 + $0x50] sm:$0xff] %v793
  %810 = vst [vmem:[%s4 + $0x58] sm:$0xff] %v794
  %811 = vst [vmem:[%s4 + $0x60] sm:$0xff] %v795
  %812 = vst [vmem:[%s4 + $0x68] sm:$0xff] %v796
  %813 = vst [vmem:[%s4 + $0x70] sm:$0xff] %v797
  %814 = vst [vmem:[%s4 + $0x78] sm:$0xff] %v798
  %815 = vrot.lane.b32.xlu0 %v316, 112
  %v816 = vpop.permute.xlu0 %815
  %817 = vrot.lane.b32.xlu0 %v322, 112
  %v818 = vpop.permute.xlu0 %817
  %819 = vrot.lane.b32.xlu0 %v328, 112
  %v820 = vpop.permute.xlu0 %819
  %821 = vrot.lane.b32.xlu0 %v334, 112
  %v822 = vpop.permute.xlu0 %821
  %823 = vrot.lane.b32.xlu0 %v318, 112
  %v824 = vpop.permute.xlu0 %823
  %825 = vrot.lane.b32.xlu0 %v324, 112
  %v826 = vpop.permute.xlu0 %825
  %827 = vrot.lane.b32.xlu0 %v330, 112
  %v828 = vpop.permute.xlu0 %827
  %829 = vrot.lane.b32.xlu0 %v336, 112
  %v830 = vpop.permute.xlu0 %829
  %831 = vrot.lane.b32.xlu0 %v573, 112
  %v832 = vpop.permute.xlu0 %831
  %833 = vrot.lane.b32.xlu0 %v579, 112
  %v834 = vpop.permute.xlu0 %833
  %835 = vrot.lane.b32.xlu0 %v585, 112
  %v836 = vpop.permute.xlu0 %835
  %837 = vrot.lane.b32.xlu0 %v591, 112
  %v838 = vpop.permute.xlu0 %837
  %839 = vrot.lane.b32.xlu0 %v575, 112
  %v840 = vpop.permute.xlu0 %839
  %841 = vrot.lane.b32.xlu0 %v581, 112
  %v842 = vpop.permute.xlu0 %841
  %843 = vrot.lane.b32.xlu0 %v587, 112
  %v844 = vpop.permute.xlu0 %843
  %845 = vrot.lane.b32.xlu0 %v593, 112
  %v846 = vpop.permute.xlu0 %845
  %v847 = vsel %vm701, %v832, %v840
  %v848 = vsel %vm701, %v834, %v842
  %v849 = vsel %vm701, %v836, %v844
  %v850 = vsel %vm701, %v838, %v846
  %v851 = vsel %vm701, %v824, %v832
  %v852 = vsel %vm701, %v826, %v834
  %v853 = vsel %vm701, %v828, %v836
  %v854 = vsel %vm701, %v830, %v838
  %v855 = vsel %vm701, %v816, %v824
  %v856 = vsel %vm701, %v818, %v826
  %v857 = vsel %vm701, %v820, %v828
  %v858 = vsel %vm701, %v822, %v830
  %v859 = vsel %vm701, %v840, %v816
  %v860 = vsel %vm701, %v842, %v818
  %v861 = vsel %vm701, %v844, %v820
  %v862 = vsel %vm701, %v846, %v822
  %v863 = vadd.f32 %v292, %v855
  %v864 = vadd.f32 %v294, %v851
  %v865 = vadd.f32 %v549, %v847
  %v866 = vadd.f32 %v551, %v859
  %v867 = vadd.f32 %v298, %v856
  %v868 = vadd.f32 %v300, %v852
  %v869 = vadd.f32 %v555, %v848
  %v870 = vadd.f32 %v557, %v860
  %v871 = vadd.f32 %v304, %v857
  %v872 = vadd.f32 %v306, %v853
  %v873 = vadd.f32 %v561, %v849
  %v874 = vadd.f32 %v563, %v861
  %v875 = vadd.f32 %v310, %v858
  %v876 = vadd.f32 %v312, %v854
  %v877 = vadd.f32 %v567, %v850
  %v878 = vadd.f32 %v569, %v862
  %879 = vrot.lane.b32.xlu0 %v340, 96
  %v880 = vpop.permute.xlu0 %879
  %881 = vrot.lane.b32.xlu0 %v346, 96
  %v882 = vpop.permute.xlu0 %881
  %883 = vrot.lane.b32.xlu0 %v352, 96
  %v884 = vpop.permute.xlu0 %883
  %885 = vrot.lane.b32.xlu0 %v358, 96
  %v886 = vpop.permute.xlu0 %885
  %887 = vrot.lane.b32.xlu0 %v342, 96
  %v888 = vpop.permute.xlu0 %887
  %889 = vrot.lane.b32.xlu0 %v348, 96
  %v890 = vpop.permute.xlu0 %889
  %891 = vrot.lane.b32.xlu0 %v354, 96
  %v892 = vpop.permute.xlu0 %891
  %893 = vrot.lane.b32.xlu0 %v360, 96
  %v894 = vpop.permute.xlu0 %893
  %895 = vrot.lane.b32.xlu0 %v597, 96
  %v896 = vpop.permute.xlu0 %895
  %897 = vrot.lane.b32.xlu0 %v603, 96
  %v898 = vpop.permute.xlu0 %897
  %899 = vrot.lane.b32.xlu0 %v609, 96
  %v900 = vpop.permute.xlu0 %899
  %901 = vrot.lane.b32.xlu0 %v615, 96
  %v902 = vpop.permute.xlu0 %901
  %903 = vrot.lane.b32.xlu0 %v599, 96
  %v904 = vpop.permute.xlu0 %903
  %905 = vrot.lane.b32.xlu0 %v605, 96
  %v906 = vpop.permute.xlu0 %905
  %907 = vrot.lane.b32.xlu0 %v611, 96
  %v908 = vpop.permute.xlu0 %907
  %909 = vrot.lane.b32.xlu0 %v617, 96
  %v910 = vpop.permute.xlu0 %909
  %v911 = vsel %vm766, %v896, %v904
  %v912 = vsel %vm766, %v898, %v906
  %v913 = vsel %vm766, %v900, %v908
  %v914 = vsel %vm766, %v902, %v910
  %v915 = vsel %vm766, %v888, %v896
  %v916 = vsel %vm766, %v890, %v898
  %v917 = vsel %vm766, %v892, %v900
  %v918 = vsel %vm766, %v894, %v902
  %v919 = vsel %vm766, %v880, %v888
  %v920 = vsel %vm766, %v882, %v890
  %v921 = vsel %vm766, %v884, %v892
  %v922 = vsel %vm766, %v886, %v894
  %v923 = vsel %vm766, %v904, %v880
  %v924 = vsel %vm766, %v906, %v882
  %v925 = vsel %vm766, %v908, %v884
  %v926 = vsel %vm766, %v910, %v886
  %v927 = vadd.f32 %v863, %v919
  %v928 = vadd.f32 %v864, %v915
  %v929 = vadd.f32 %v865, %v911
  %v930 = vadd.f32 %v866, %v923
  %v931 = vadd.f32 %v867, %v920
  %v932 = vadd.f32 %v868, %v916
  %v933 = vadd.f32 %v869, %v912
  %v934 = vadd.f32 %v870, %v924
  %v935 = vadd.f32 %v871, %v921
  %v936 = vadd.f32 %v872, %v917
  %v937 = vadd.f32 %v873, %v913
  %v938 = vadd.f32 %v874, %v925
  %v939 = vadd.f32 %v875, %v922
  %v940 = vadd.f32 %v876, %v918
  %v941 = vadd.f32 %v877, %v914
  %v942 = vadd.f32 %v878, %v926
  %943 = vrot.lane.b32.xlu0 %v364, 80
  %v944 = vpop.permute.xlu0 %943
  %945 = vrot.lane.b32.xlu0 %v370, 80
  %v946 = vpop.permute.xlu0 %945
  %947 = vrot.lane.b32.xlu0 %v376, 80
  %v948 = vpop.permute.xlu0 %947
  %949 = vrot.lane.b32.xlu0 %v382, 80
  %v950 = vpop.permute.xlu0 %949
  %951 = vrot.lane.b32.xlu0 %v366, 80
  %v952 = vpop.permute.xlu0 %951
  %953 = vrot.lane.b32.xlu0 %v372, 80
  %v954 = vpop.permute.xlu0 %953
  %955 = vrot.lane.b32.xlu0 %v378, 80
  %v956 = vpop.permute.xlu0 %955
  %957 = vrot.lane.b32.xlu0 %v384, 80
  %v958 = vpop.permute.xlu0 %957
  %959 = vrot.lane.b32.xlu0 %v621, 80
  %v960 = vpop.permute.xlu0 %959
  %961 = vrot.lane.b32.xlu0 %v627, 80
  %v962 = vpop.permute.xlu0 %961
  %963 = vrot.lane.b32.xlu0 %v633, 80
  %v964 = vpop.permute.xlu0 %963
  %965 = vrot.lane.b32.xlu0 %v639, 80
  %v966 = vpop.permute.xlu0 %965
  %967 = vrot.lane.b32.xlu0 %v623, 80
  %v968 = vpop.permute.xlu0 %967
  %969 = vrot.lane.b32.xlu0 %v629, 80
  %v970 = vpop.permute.xlu0 %969
  %971 = vrot.lane.b32.xlu0 %v635, 80
  %v972 = vpop.permute.xlu0 %971
  %973 = vrot.lane.b32.xlu0 %v641, 80
  %v974 = vpop.permute.xlu0 %973
  %vm975 = vcmp.lt.s32.totalorder %v700, 80
  %v976 = vsel %vm975, %v960, %v968
  %v977 = vsel %vm975, %v962, %v970
  %v978 = vsel %vm975, %v964, %v972
  %v979 = vsel %vm975, %v966, %v974
  %v980 = vsel %vm975, %v952, %v960
  %v981 = vsel %vm975, %v954, %v962
  %v982 = vsel %vm975, %v956, %v964
  %v983 = vsel %vm975, %v958, %v966
  %v984 = vsel %vm975, %v944, %v952
  %v985 = vsel %vm975, %v946, %v954
  %v986 = vsel %vm975, %v948, %v956
  %v987 = vsel %vm975, %v950, %v958
  %v988 = vsel %vm975, %v968, %v944
  %v989 = vsel %vm975, %v970, %v946
  %v990 = vsel %vm975, %v972, %v948
  %v991 = vsel %vm975, %v974, %v950
  %v992 = vadd.f32 %v927, %v984
  %v993 = vadd.f32 %v928, %v980
  %v994 = vadd.f32 %v929, %v976
  %v995 = vadd.f32 %v930, %v988
  %v996 = vadd.f32 %v931, %v985
  %v997 = vadd.f32 %v932, %v981
  %v998 = vadd.f32 %v933, %v977
  %v999 = vadd.f32 %v934, %v989
  %v1000 = vadd.f32 %v935, %v986
  %v1001 = vadd.f32 %v936, %v982
  %v1002 = vadd.f32 %v937, %v978
  %v1003 = vadd.f32 %v938, %v990
  %v1004 = vadd.f32 %v939, %v987
  %v1005 = vadd.f32 %v940, %v983
  %v1006 = vadd.f32 %v941, %v979
  %v1007 = vadd.f32 %v942, %v991
  %1008 = vrot.lane.b32.xlu0 %v388, 64
  %v1009 = vpop.permute.xlu0 %1008
  %1010 = vrot.lane.b32.xlu0 %v394, 64
  %v1011 = vpop.permute.xlu0 %1010
  %1012 = vrot.lane.b32.xlu0 %v400, 64
  %v1013 = vpop.permute.xlu0 %1012
  %1014 = vrot.lane.b32.xlu0 %v406, 64
  %v1015 = vpop.permute.xlu0 %1014
  %1016 = vrot.lane.b32.xlu0 %v390, 64
  %v1017 = vpop.permute.xlu0 %1016
  %1018 = vrot.lane.b32.xlu0 %v396, 64
  %v1019 = vpop.permute.xlu0 %1018
  %1020 = vrot.lane.b32.xlu0 %v402, 64
  %v1021 = vpop.permute.xlu0 %1020
  %1022 = vrot.lane.b32.xlu0 %v408, 64
  %v1023 = vpop.permute.xlu0 %1022
  %1024 = vrot.lane.b32.xlu0 %v645, 64
  %v1025 = vpop.permute.xlu0 %1024
  %1026 = vrot.lane.b32.xlu0 %v651, 64
  %v1027 = vpop.permute.xlu0 %1026
  %1028 = vrot.lane.b32.xlu0 %v657, 64
  %v1029 = vpop.permute.xlu0 %1028
  %1030 = vrot.lane.b32.xlu0 %v663, 64
  %v1031 = vpop.permute.xlu0 %1030
  %1032 = vrot.lane.b32.xlu0 %v647, 64
  %v1033 = vpop.permute.xlu0 %1032
  %1034 = vrot.lane.b32.xlu0 %v653, 64
  %v1035 = vpop.permute.xlu0 %1034
  %1036 = vrot.lane.b32.xlu0 %v659, 64
  %v1037 = vpop.permute.xlu0 %1036
  %1038 = vrot.lane.b32.xlu0 %v665, 64
  %v1039 = vpop.permute.xlu0 %1038
  %vm1040 = vcmp.lt.s32.totalorder %v700, 64
  %v1041 = vsel %vm1040, %v1025, %v1033
  %v1042 = vsel %vm1040, %v1027, %v1035
  %v1043 = vsel %vm1040, %v1029, %v1037
  %v1044 = vsel %vm1040, %v1031, %v1039
  %v1045 = vsel %vm1040, %v1017, %v1025
  %v1046 = vsel %vm1040, %v1019, %v1027
  %v1047 = vsel %vm1040, %v1021, %v1029
  %v1048 = vsel %vm1040, %v1023, %v1031
  %v1049 = vsel %vm1040, %v1009, %v1017
  %v1050 = vsel %vm1040, %v1011, %v1019
  %v1051 = vsel %vm1040, %v1013, %v1021
  %v1052 = vsel %vm1040, %v1015, %v1023
  %v1053 = vsel %vm1040, %v1033, %v1009
  %v1054 = vsel %vm1040, %v1035, %v1011
  %v1055 = vsel %vm1040, %v1037, %v1013
  %v1056 = vsel %vm1040, %v1039, %v1015
  %v1057 = vadd.f32 %v992, %v1049
  %v1058 = vadd.f32 %v993, %v1045
  %v1059 = vadd.f32 %v994, %v1041
  %v1060 = vadd.f32 %v995, %v1053
  %v1061 = vadd.f32 %v996, %v1050
  %v1062 = vadd.f32 %v997, %v1046
  %v1063 = vadd.f32 %v998, %v1042
  %v1064 = vadd.f32 %v999, %v1054
  %v1065 = vadd.f32 %v1000, %v1051
  %v1066 = vadd.f32 %v1001, %v1047
  %v1067 = vadd.f32 %v1002, %v1043
  %v1068 = vadd.f32 %v1003, %v1055
  %v1069 = vadd.f32 %v1004, %v1052
  %v1070 = vadd.f32 %v1005, %v1048
  %v1071 = vadd.f32 %v1006, %v1044
  %v1072 = vadd.f32 %v1007, %v1056
  %1073 = vst [vmem:[%s5] sm:$0xff] %v1057
  %1074 = vst [vmem:[%s5 + $0x8] sm:$0xff] %v1058
  %1075 = vst [vmem:[%s5 + $0x10] sm:$0xff] %v1059
  %1076 = vst [vmem:[%s5 + $0x18] sm:$0xff] %v1060
  %1077 = vst [vmem:[%s5 + $0x20] sm:$0xff] %v1061
  %1078 = vst [vmem:[%s5 + $0x28] sm:$0xff] %v1062
  %1079 = vst [vmem:[%s5 + $0x30] sm:$0xff] %v1063
  %1080 = vst [vmem:[%s5 + $0x38] sm:$0xff] %v1064
  %1081 = vst [vmem:[%s5 + $0x40] sm:$0xff] %v1065
  %1082 = vst [vmem:[%s5 + $0x48] sm:$0xff] %v1066
  %1083 = vst [vmem:[%s5 + $0x50] sm:$0xff] %v1067
  %1084 = vst [vmem:[%s5 + $0x58] sm:$0xff] %v1068
  %1085 = vst [vmem:[%s5 + $0x60] sm:$0xff] %v1069
  %1086 = vst [vmem:[%s5 + $0x68] sm:$0xff] %v1070
  %1087 = vst [vmem:[%s5 + $0x70] sm:$0xff] %v1071
  %1088 = vst [vmem:[%s5 + $0x78] sm:$0xff] %v1072
  %v1089 = vld [vmem:[%s1] sm:$0xff]
  %v1090 = vld [vmem:[%s1 + $0x8] sm:$0xff]
  %s1091 = scalar_lea.vmem %s1, 16
  %v1092 = vld [vmem:[%s1091] sm:$0xff]
  %v1093 = vld [vmem:[%s1091 + $0x8] sm:$0xff]
  %v1094 = vmax.f32 %v1089, %v1092
  %v1095 = vmax.f32 %v1090, %v1093
  %s1096 = scalar_lea.vmem %s1, 32
  %v1097 = vld [vmem:[%s1096] sm:$0xff]
  %v1098 = vld [vmem:[%s1096 + $0x8] sm:$0xff]
  %v1099 = vmax.f32 %v1094, %v1097
  %v1100 = vmax.f32 %v1095, %v1098
  %v1101 = vld [vmem:[%s3] sm:$0xff]
  %v1102 = vld [vmem:[%s3 + $0x8] sm:$0xff]
  %v1103 = vld [vmem:[%s3 + $0x10] sm:$0xff]
  %v1104 = vld [vmem:[%s3 + $0x18] sm:$0xff]
  %v1106 = vsel %vm56, %v1101, 0
  %v1109 = vsel %vm56, %v1102, 0
  %v1112 = vsel %vm56, %v1103, 0
  %v1115 = vsel %vm56, %v1104, 0
  %1117 = vmatprep.subr.mxu0 0.0
  %1118 = vmatpush1.msra.mxu0 0.0
  %1119 = vmatprep.subr.mxu0 0.0
  %1120 = vmatpush1.msra.mxu0 0.0
  %1121 = vmatprep.subr.mxu0 0.0
  %1122 = vmatpush1.msra.mxu0 0.0
  %1123 = vmatprep.subr.mxu0 0.0
  %1124 = vmatpush1.msra.mxu0 0.0
  %1125 = vmatprep.subr.mxu0 0.0
  %1126 = vmatpush1.msra.mxu0 0.0
  %1127 = vmatprep.subr.mxu0 0.0
  %1128 = vmatpush1.msra.mxu0 0.0
  %1129 = vmatprep.subr.mxu0 0.0
  %1130 = vmatpush1.msra.mxu0 0.0
  %1131 = vmatprep.subr.mxu0 0.0
  %1132 = vmatpush1.msra.mxu0 0.0
  %1133 = vmatprep.subr.mxu0 0.0
  %1134 = vmatpush1.msra.mxu0 0.0
  %1135 = vmatprep.subr.mxu0 0.0
  %1136 = vmatpush1.msra.mxu0 0.0
  %1137 = vmatprep.subr.mxu0 0.0
  %1138 = vmatpush1.msra.mxu0 0.0
  %1139 = vmatprep.subr.mxu0 0.0
  %1140 = vmatpush1.msra.mxu0 0.0
  %1141 = vmatprep.subr.mxu0 0.0
  %1142 = vmatpush1.msra.mxu0 0.0
  %1143 = vmatprep.subr.mxu0 0.0
  %1144 = vmatpush1.msra.mxu0 0.0
  %1145 = vmatprep.subr.mxu0 0.0
  %1146 = vmatpush1.msra.mxu0 0.0
  %1147 = vmatprep.subr.mxu0 %v1100
  %1148 = vmatpush1.msra.mxu0 %v1099
  %1149 = vmatprep.subr.mxu0 0.0
  %1150 = vmatpush2.msra.mxu0 0.0
  %1151 = vmatprep.subr.mxu0 0.0
  %1152 = vmatpush2.msra.mxu0 0.0
  %1153 = vmatprep.subr.mxu0 0.0
  %1154 = vmatpush2.msra.mxu0 0.0
  %1155 = vmatprep.subr.mxu0 0.0
  %1156 = vmatpush2.msra.mxu0 0.0
  %1157 = vmatprep.subr.mxu0 0.0
  %1158 = vmatpush2.msra.mxu0 0.0
  %1159 = vmatprep.subr.mxu0 0.0
  %1160 = vmatpush2.msra.mxu0 0.0
  %1161 = vmatprep.subr.mxu0 0.0
  %1162 = vmatpush2.msra.mxu0 0.0
  %1163 = vmatprep.subr.mxu0 0.0
  %1164 = vmatpush2.msra.mxu0 0.0
  %1165 = vmatprep.subr.mxu0 0.0
  %1166 = vmatpush2.msra.mxu0 0.0
  %1167 = vmatprep.subr.mxu0 0.0
  %1168 = vmatpush2.msra.mxu0 0.0
  %1169 = vmatprep.subr.mxu0 0.0
  %1170 = vmatpush2.msra.mxu0 0.0
  %1171 = vmatprep.subr.mxu0 0.0
  %1172 = vmatpush2.msra.mxu0 0.0
  %1173 = vmatprep.subr.mxu0 0.0
  %1174 = vmatpush2.msra.mxu0 0.0
  %1175 = vmatprep.subr.mxu0 0.0
  %1176 = vmatpush2.msra.mxu0 0.0
  %1177 = vmatprep.subr.mxu0 0.0
  %1178 = vmatpush2.msra.mxu0 0.0
  %1179 = vmatprep.subr.mxu0 0.0
  %1180 = vmatpush2.msra.mxu0 0.0
  %1181 = vmatprep.mubr.f32.mxu0 0.0
  %1182 = vmatmul.mubr.f32.gmra.mxu0 %v1106
  %v1183 = vpop.f32.mrf.mxu0
  %v1184 = vadd.f32 0.0, %v1183
  %v1185 = vpop.f32.mrf.mxu0
  %v1186 = vadd.f32 0.0, %v1185
  %1187 = vmatprep.mubr.f32.mxu0 0.0
  %1188 = vmatmul.mubr.f32.gmra.mxu0 %v1109
  %v1189 = vpop.f32.mrf.mxu0
  %v1190 = vadd.f32 0.0, %v1189
  %v1191 = vpop.f32.mrf.mxu0
  %v1192 = vadd.f32 0.0, %v1191
  %1193 = vmatprep.mubr.f32.mxu0 0.0
  %1194 = vmatmul.mubr.f32.gmra.mxu0 %v1112
  %v1195 = vpop.f32.mrf.mxu0
  %v1196 = vadd.f32 0.0, %v1195
  %v1197 = vpop.f32.mrf.mxu0
  %v1198 = vadd.f32 0.0, %v1197
  %1199 = vmatprep.mubr.f32.mxu0 0.0
  %1200 = vmatmul.mubr.f32.gmra.mxu0 %v1115
  %v1201 = vpop.f32.mrf.mxu0
  %v1202 = vadd.f32 0.0, %v1201
  %v1203 = vpop.f32.mrf.mxu0
  %v1204 = vadd.f32 0.0, %v1203
  %1205 = vdwg.mxu0
  %1206 = vst [vmem:[%s6] sm:$0xff] %v1184
  %1207 = vst [vmem:[%s6 + $0x8] sm:$0xff] %v1186
  %1208 = vst [vmem:[%s6 + $0x10] sm:$0xff] %v1190
  %1209 = vst [vmem:[%s6 + $0x18] sm:$0xff] %v1192
  %1210 = vst [vmem:[%s6 + $0x20] sm:$0xff] %v1196
  %1211 = vst [vmem:[%s6 + $0x28] sm:$0xff] %v1198
  %1212 = vst [vmem:[%s6 + $0x30] sm:$0xff] %v1202
  %1213 = vst [vmem:[%s6 + $0x38] sm:$0xff] %v1204
  // Predicated region
  $region18: #{inception_forward.1} parent=0 // pred_check
    _
  $region19: #{inception_forward.1} parent=0 // pred_check_branch
    %1215 = sbr.rel (0) target = $region21
  $region20: #{inception_forward.1} parent=0 // pred_region
    _
  $region21: #{inception_forward.1} parent=0 // pred_fallthru
    _
  // Predicated region
  $region22: #{inception_forward.1} parent=0 // pred_check
    _
  $region23: #{inception_forward.1} parent=0 // pred_check_branch
    %1217 = sbr.rel (0) target = $region25
  $region24: #{inception_forward.1} parent=0 // pred_region
    _
  $region25: #{inception_forward.1} parent=0 // pred_fallthru
    _
  // Predicated region
  $region26: #{inception_forward.1} parent=0 // pred_check
    _
  $region27: #{inception_forward.1} parent=0 // pred_check_branch
    %1219 = sbr.rel (0) target = $region29
  $region28: #{inception_forward.1} parent=0 // pred_region
    _
  $region29: #{inception_forward.1} parent=0 // pred_fallthru
    _
  // Predicated region
  $region30: #{inception_forward.1} parent=0 // pred_check
    _
  $region31: #{inception_forward.1} parent=0 // pred_check_branch
    %1221 = sbr.rel (0) target = $region33
  $region32: #{inception_forward.1} parent=0 // pred_region
    _
  $region33: #{inception_forward.1} parent=0 // pred_fallthru
    _
  // Predicated region
  $region34: #{inception_forward.1} parent=0 // pred_check
    _
  $region35: #{inception_forward.1} parent=0 // pred_check_branch
    %1223 = sbr.rel (0) target = $region37
  $region36: #{inception_forward.1} parent=0 // pred_region
    _
  $region37: #{inception_forward.1} parent=0 // pred_fallthru
    _
  // Predicated region
  $region38: #{inception_forward.1} parent=0 // pred_check
    _
  $region39: #{inception_forward.1} parent=0 // pred_check_branch
    %1225 = sbr.rel (0) target = $region41
  $region40: #{inception_forward.1} parent=0 // pred_region
    _
  $region41: #{inception_forward.1} parent=0 // pred_fallthru
    _

</llo_original>
